<compile_context>
chip_gen: v7x
topology: tpu7x:2x2x1
jax: 0.10.0
libtpu: 0.0.40
codegen_flags: <defaults>
</compile_context>

<pallas_src>
import jax
import jax.numpy as jnp
from jax.experimental import pallas as pl
from jax.experimental.pallas import tpu as pltpu

LANES = 128


def _round_up(a, b):
    return ((a + b - 1) // b) * b


def _default_tile_rows():
    """Packed-row tile default, sized against each generation's scoped VMEM."""
    try:
        kind = jax.devices()[0].device_kind.lower()
    except Exception:
        kind = ""
    if "v5 lite" in kind or "v5e" in kind or "v5lite" in kind:
        return 2048   # ~11 MiB peak (x/out dbl-buf + f32/bf16 h) < 16 MiB default
    return 4096       # v6e / v7x: ~22 MiB peak < 32 MiB default scoped limit


def _ffn_packed_kernel(x_ref, w1_ref, b1_ref, w2_ref, b2_ref, o_ref):
    # x_ref : (TM, 128) f32    -- 8 logical rows of d_model=16 per 128-lane row
    # w1_ref: (128, 512) bf16, b1_ref: (1, 512) f32  -- block-diag fc1, tiled bias
    # w2_ref: (512, 128) bf16, b2_ref: (1, 128) f32  -- block-diag fc2, tiled bias
    x = x_ref[...].astype(jnp.bfloat16)                  # bf16 MXU operand
    h = jnp.dot(x, w1_ref[...], preferred_element_type=jnp.float32)
    h = jnp.maximum(h + b1_ref[...], 0.0)                # f32 bias + ReLU
    h = h.astype(jnp.bfloat16)                           # bf16 second MXU pass
    y = jnp.dot(h, w2_ref[...], preferred_element_type=jnp.float32)
    o_ref[...] = (y + b2_ref[...]).astype(o_ref.dtype)


def pack_ffn_params(w1, b1, w2, b2, *, lane_width=LANES):
    """Build lane-dense block-diagonal FFN weights ONCE (hoisted per-param cost).

    w1: (d_model, d_ff), b1: (d_ff,), w2: (d_ff, d_model), b2: (d_model,).
    Weights are stored (in_features, out_features) — transpose of PyTorch's
    nn.Linear weight — so the kernel computes x @ W + b.
    """
    d_model, d_ff = w1.shape
    assert lane_width % d_model == 0, "lane packing assumes d_model divides 128"
    pack = lane_width // d_model
    eye = jnp.eye(pack, dtype=jnp.float32)
    w1_bd = jnp.einsum("ij,pq->ipjq", eye, w1.astype(jnp.float32))
    w1_bd = w1_bd.reshape(pack * d_model, pack * d_ff).astype(jnp.bfloat16)
    w2_bd = jnp.einsum("ij,pq->ipjq", eye, w2.astype(jnp.float32))
    w2_bd = w2_bd.reshape(pack * d_ff, pack * d_model).astype(jnp.bfloat16)
    b1_row = jnp.tile(b1.astype(jnp.float32), pack).reshape(1, pack * d_ff)
    b2_row = jnp.tile(b2.astype(jnp.float32), pack).reshape(1, pack * d_model)
    return dict(w1_bd=w1_bd, b1_row=b1_row, w2_bd=w2_bd, b2_row=b2_row,
                d_model=d_model, d_ff=d_ff, pack=pack)


def ffn_forward_packed(x, params, *, tile_rows=None):
    """x: (..., d_model) -> (..., d_model), using pre-packed params."""
    d_model = params["d_model"]
    d_ff = params["d_ff"]
    pack = params["pack"]
    orig_shape = x.shape
    assert orig_shape[-1] == d_model

    x2 = x.reshape(-1, d_model)
    m = x2.shape[0]

    # Pad only the tail so rows pack into sublane-aligned (Mp, 128) rows
    # (<= 63 extra rows) — no full round-up to a tile multiple.
    row_align = pack * 8
    m_pad = _round_up(max(m, 1), row_align)
    if m_pad != m:
        x2 = jnp.pad(x2, ((0, m_pad - m), (0, 0)))
    mp = m_pad // pack                              # packed rows, multiple of 8
    x_packed = x2.reshape(mp, pack * d_model)       # (Mp, 128), free reshape

    if tile_rows is None:
        tile_rows = _default_tile_rows()
    tile_rows = _round_up(max(int(tile_rows), 8), 8)   # keep (8,128) tiling legal
    # Prefer >= 2 grid steps when possible so v7x's two TCs both get work.
    tm = min(tile_rows, max(8, _round_up(pl.cdiv(mp, 2), 8)))
    grid = (pl.cdiv(mp, tm),)                       # partial last block is OK

    pd_m = pack * d_model                           # 128
    pd_ff = pack * d_ff                             # 512
    itemsize = jnp.dtype(x.dtype).itemsize
    flops = 4 * mp * pd_m * pd_ff                   # two matmuls
    bytes_accessed = (2 * mp * pd_m * itemsize                      # x + out
                      + (params["w1_bd"].size + params["w2_bd"].size) * 2
                      + (params["b1_row"].size + params["b2_row"].size) * 4)

    out_packed = pl.pallas_call(
        _ffn_packed_kernel,
        out_shape=jax.ShapeDtypeStruct((mp, pd_m), x.dtype),
        grid=grid,
        in_specs=[
            pl.BlockSpec((tm, pd_m), lambda i: (i, 0)),       # x tile (dbl-buf)
            pl.BlockSpec((pd_m, pd_ff), lambda i: (0, 0)),    # W1 resident
            pl.BlockSpec((1, pd_ff), lambda i: (0, 0)),       # b1 resident
            pl.BlockSpec((pd_ff, pd_m), lambda i: (0, 0)),    # W2 resident
            pl.BlockSpec((1, pd_m), lambda i: (0, 0)),        # b2 resident
        ],
        out_specs=pl.BlockSpec((tm, pd_m), lambda i: (i, 0)),
        compiler_params=pltpu.CompilerParams(
            dimension_semantics=("parallel",)),
        cost_estimate=pl.CostEstimate(
            flops=flops, transcendentals=0, bytes_accessed=bytes_accessed),
    )(x_packed, params["w1_bd"], params["b1_row"],
      params["w2_bd"], params["b2_row"])

    out = out_packed.reshape(m_pad, d_model)[:m]
    return out.reshape(orig_shape)


def position_wise_feed_forward(x, w1, b1, w2, b2, *, tile_rows=None):
    """One-shot convenience wrapper (packs weights per call; prefer
    pack_ffn_params + ffn_forward_packed when calling repeatedly)."""
    return ffn_forward_packed(x, pack_ffn_params(w1, b1, w2, b2),
                              tile_rows=tile_rows)


if __name__ == "__main__":
    d_model = 16
    d_ff = 64
    batch, seq = 2, 8

    key = jax.random.PRNGKey(0)
    kx, kw1, kb1, kw2, kb2 = jax.random.split(key, 5)

    # Deterministic parameter init (PyTorch Linear-style uniform bounds).
    bound1 = 1.0 / (d_model ** 0.5)
    bound2 = 1.0 / (d_ff ** 0.5)
    # Stored as (in_features, out_features) — transpose of PyTorch's weight.
    w1 = jax.random.uniform(kw1, (d_model, d_ff), jnp.float32, -bound1, bound1)
    b1 = jax.random.uniform(kb1, (d_ff,), jnp.float32, -bound1, bound1)
    w2 = jax.random.uniform(kw2, (d_ff, d_model), jnp.float32, -bound2, bound2)
    b2 = jax.random.uniform(kb2, (d_model,), jnp.float32, -bound2, bound2)

    x = jax.random.uniform(kx, (batch, seq, d_model), jnp.float32)

    # Pack weights once (hoisted), then run the kernel.
    packed = pack_ffn_params(w1, b1, w2, b2)
    y = ffn_forward_packed(x, packed)
    jax.block_until_ready(y)

    # Pure-JAX f32 reference check (kernel uses bf16 MXU operands, f32 accum).
    ref = jnp.maximum(x @ w1 + b1, 0.0) @ w2 + b2
    assert y.shape == x.shape
    assert jnp.allclose(y, ref, atol=3e-2, rtol=3e-2), \
        float(jnp.max(jnp.abs(y - ref)))

    print("KERNEL_OK")
</pallas_src>

<mosaic_0001>
module attributes {stable_mosaic.version = 11 : i64} {
  func.func @_ffn_packed_kernel(%arg0: i32, %arg1: memref<8x128xf32, #tpu.memory_space<vmem>>, %arg2: memref<128x512xbf16, #tpu.memory_space<vmem>>, %arg3: memref<1x512xf32, #tpu.memory_space<vmem>>, %arg4: memref<512x128xbf16, #tpu.memory_space<vmem>>, %arg5: memref<1x128xf32, #tpu.memory_space<vmem>>, %arg6: memref<8x128xf32, #tpu.memory_space<vmem>>) attributes {dimension_semantics = [#tpu.dimension_semantics<parallel>], iteration_bounds = array<i64: 1>, scalar_prefetch = 0 : i64, scratch_operands = 0 : i64, tpu.core_type = #tpu.core_type<tc>, window_params = [{transform_indices = @transform_0, window_bounds = array<i64: 8, 128>}, {pipeline_mode = #tpu.pipeline_mode<synchronous>, transform_indices = @transform_1, window_bounds = array<i64: 128, 512>}, {pipeline_mode = #tpu.pipeline_mode<synchronous>, transform_indices = @transform_2, window_bounds = array<i64: 1, 512>}, {pipeline_mode = #tpu.pipeline_mode<synchronous>, transform_indices = @transform_3, window_bounds = array<i64: 512, 128>}, {pipeline_mode = #tpu.pipeline_mode<synchronous>, transform_indices = @transform_4, window_bounds = array<i64: 1, 128>}, {transform_indices = @transform_5, window_bounds = array<i64: 8, 128>}]} {
    %c0 = arith.constant 0 : index
    %c0_0 = arith.constant 0 : index
    %0 = vector.load %arg1[%c0, %c0_0] : memref<8x128xf32, #tpu.memory_space<vmem>>, vector<8x128xf32>
    %1 = arith.truncf %0 : vector<8x128xf32> to vector<8x128xbf16>
    %c0_1 = arith.constant 0 : index
    %c0_2 = arith.constant 0 : index
    %2 = vector.load %arg2[%c0_1, %c0_2] : memref<128x512xbf16, #tpu.memory_space<vmem>>, vector<128x512xbf16>
    %cst = arith.constant dense<0.000000e+00> : vector<8x512xf32>
    %3 = tpu.matmul %1, %2, %cst {dimension_numbers = #tpu.dot_dimension_numbers<[1], [0], [0], [1], [0, 0, 1, 1], [], []>} : vector<8x128xbf16>, vector<128x512xbf16>, vector<8x512xf32> -> vector<8x512xf32>
    %c0_3 = arith.constant 0 : index
    %c0_4 = arith.constant 0 : index
    %4 = vector.load %arg3[%c0_3, %c0_4] : memref<1x512xf32, #tpu.memory_space<vmem>>, vector<1x512xf32>
    %5 = vector.broadcast %4 : vector<1x512xf32> to vector<8x512xf32>
    %6 = arith.addf %3, %5 : vector<8x512xf32>
    %cst_5 = arith.constant 0.000000e+00 : f32
    %7 = vector.broadcast %cst_5 : f32 to vector<8x512xf32>
    %8 = arith.maximumf %6, %7 : vector<8x512xf32>
    %9 = arith.truncf %8 : vector<8x512xf32> to vector<8x512xbf16>
    %c0_6 = arith.constant 0 : index
    %c0_7 = arith.constant 0 : index
    %10 = vector.load %arg4[%c0_6, %c0_7] : memref<512x128xbf16, #tpu.memory_space<vmem>>, vector<512x128xbf16>
    %cst_8 = arith.constant dense<0.000000e+00> : vector<8x128xf32>
    %11 = tpu.matmul %9, %10, %cst_8 {dimension_numbers = #tpu.dot_dimension_numbers<[1], [0], [0], [1], [0, 0, 1, 1], [], []>} : vector<8x512xbf16>, vector<512x128xbf16>, vector<8x128xf32> -> vector<8x128xf32>
    %c0_9 = arith.constant 0 : index
    %c0_10 = arith.constant 0 : index
    %12 = vector.load %arg5[%c0_9, %c0_10] : memref<1x128xf32, #tpu.memory_space<vmem>>, vector<1x128xf32>
    %13 = vector.broadcast %12 : vector<1x128xf32> to vector<8x128xf32>
    %14 = arith.addf %11, %13 : vector<8x128xf32>
    %c0_11 = arith.constant 0 : index
    %c0_12 = arith.constant 0 : index
    %15 = vector.load %arg6[%c0_11, %c0_12] : memref<8x128xf32, #tpu.memory_space<vmem>>, vector<8x128xf32>
    tpu.vector_store %arg6[%c0_11, %c0_12], %14 {strides = array<i32>} : memref<8x128xf32, #tpu.memory_space<vmem>>, vector<8x128xf32>,
    return
  }
  func.func @transform_0(%arg0: i32) -> (i32, i32) {
    %c0_i32 = arith.constant 0 : i32
    %c0_i32_0 = arith.constant 0 : i32
    return %arg0, %c0_i32 : i32, i32
  }
  func.func @transform_1(%arg0: i32) -> (i32, i32) {
    %c0_i32 = arith.constant 0 : i32
    %c0_i32_0 = arith.constant 0 : i32
    %c0_i32_1 = arith.constant 0 : i32
    return %c0_i32, %c0_i32_0 : i32, i32
  }
  func.func @transform_2(%arg0: i32) -> (i32, i32) {
    %c0_i32 = arith.constant 0 : i32
    %c0_i32_0 = arith.constant 0 : i32
    %c0_i32_1 = arith.constant 0 : i32
    return %c0_i32, %c0_i32_0 : i32, i32
  }
  func.func @transform_3(%arg0: i32) -> (i32, i32) {
    %c0_i32 = arith.constant 0 : i32
    %c0_i32_0 = arith.constant 0 : i32
    %c0_i32_1 = arith.constant 0 : i32
    return %c0_i32, %c0_i32_0 : i32, i32
  }
  func.func @transform_4(%arg0: i32) -> (i32, i32) {
    %c0_i32 = arith.constant 0 : i32
    %c0_i32_0 = arith.constant 0 : i32
    %c0_i32_1 = arith.constant 0 : i32
    return %c0_i32, %c0_i32_0 : i32, i32
  }
  func.func @transform_5(%arg0: i32) -> (i32, i32) {
    %c0_i32 = arith.constant 0 : i32
    %c0_i32_0 = arith.constant 0 : i32
    return %arg0, %c0_i32 : i32, i32
  }
}

</mosaic_0001>

<llo_original>
// kernel: tpu_custom_call.1
$region0: #{tpu_custom_call.1}
  #allocation0 [shape = 'u32[]', space=smem, size = 0x4, offset = 0x4, fixed_abs, tag = 'smem constant byte address 0x4 - core index']
  #allocation1 [shape = 'u32[144,128]{1,0:T(1,128)}', space=vmem, size = 0x12000, scoped, tag = 'internal scratch']
  %s0 = inlined_call_operand.hbm [shape: f32[8,128], index: 0, kind: input, shape index: {}]
  %s1 = inlined_call_operand.hbm [shape: bf16[128,512], index: 1, kind: input, shape index: {}]
  %s2 = inlined_call_operand.vmem [shape: f32[1,512], index: 2, kind: input, shape index: {}]
  %s3 = inlined_call_operand.hbm [shape: bf16[512,128], index: 3, kind: input, shape index: {}]
  %s4 = inlined_call_operand.vmem [shape: f32[1,128], index: 4, kind: input, shape index: {}]
  %s5 = inlined_call_operand.hbm [shape: f32[8,128], index: 5, kind: output, shape index: {}]
  %s6 = sld [smem:[#allocation0]]
  $region42: #{tpu_custom_call.1} parent=0
    _
  %s8 = ssub.s32 1, %s6
  %s9 = scalar_select 0, %s8, %s6
  $region1: #{tpu_custom_call.1} parent=0
    #allocation2 [shape = 'u8[4096]{0}', space=vmem, size = 0x1000, scoped, tag = 'input window, operand 0, single buffered']
    #allocation3 [shape = 's32[1]{0}', space=sflag, size = 0x4, scoped, tag = 'scoped memory for tpu_custom_call.1']
    #allocation4 [shape = 's32[1]{0}', space=sflag, size = 0x4, scoped, tag = 'scoped memory for tpu_custom_call.1']
    #allocation5 [shape = 'u8[131072]{0}', space=vmem, size = 0x20000, scoped, tag = 'input window, operand 1, single buffered']
    #allocation6 [shape = 's32[1]{0}', space=sflag, size = 0x4, scoped, tag = 'scoped memory for tpu_custom_call.1']
    #allocation7 [shape = 'u8[131072]{0}', space=vmem, size = 0x20000, scoped, tag = 'input window, operand 3, single buffered']
    #allocation8 [shape = 'u8[4096]{0}', space=vmem, size = 0x1000, scoped, tag = 'output window, operand 0, single buffered']
    %10 = vsyncpa [#allocation3], 0
    %11 = vsyncpa [#allocation6], 0
    %12 = vsyncpa [#allocation4], 0
    // Predicated region
    $region2: #{tpu_custom_call.1} parent=1 // pred_check
      _
    $region3: #{tpu_custom_call.1} parent=1 // pred_check_branch
      %14 = sbr.rel (0) target = $region5
    $region4: #{tpu_custom_call.1} parent=1 // pred_region
      %s16 = ssub.s32 128, 128
      %17 = vsyncadd [#allocation3], %s16
      %s19 = sshll.u32 [#allocation2], 4
      %s20 = int_to_ptr.vmem [resolvable:$true] %s19
      %22 = dma.hbm_to_vmem [thread:$0]  %s0, 128, %s20, [#allocation3]
    $region5: #{tpu_custom_call.1} parent=1 // pred_fallthru
      _
    // Predicated region
    $region6: #{tpu_custom_call.1} parent=1 // pred_check
      _
    $region7: #{tpu_custom_call.1} parent=1 // pred_check_branch
      %24 = sbr.rel (0) target = $region9
    $region8: #{tpu_custom_call.1} parent=1 // pred_region
      %s26 = ssub.s32 4096, 4096
      %27 = vsyncadd [#allocation6], %s26
      %s28 = sshll.u32 [#allocation5], 4
      %s29 = int_to_ptr.vmem [resolvable:$true] %s28
      %34 = dma.hbm_to_vmem [thread:$0]  %s1, 4096, %s29, [#allocation6], 256, 256, 16
    $region9: #{tpu_custom_call.1} parent=1 // pred_fallthru
      _
    // Predicated region
    $region10: #{tpu_custom_call.1} parent=1 // pred_check
      _
    $region11: #{tpu_custom_call.1} parent=1 // pred_check_branch
      %36 = sbr.rel (0) target = $region13
    $region12: #{tpu_custom_call.1} parent=1 // pred_region
      _
    $region13: #{tpu_custom_call.1} parent=1 // pred_fallthru
      _
    // Predicated region
    $region14: #{tpu_custom_call.1} parent=1 // pred_check
      _
    $region15: #{tpu_custom_call.1} parent=1 // pred_check_branch
      %38 = sbr.rel (0) target = $region17
    $region16: #{tpu_custom_call.1} parent=1 // pred_region
      %s40 = ssub.s32 4096, 4096
      %41 = vsyncadd [#allocation6], %s40
      %s42 = sshll.u32 [#allocation7], 4
      %s43 = int_to_ptr.vmem [resolvable:$true] %s42
      %48 = dma.hbm_to_vmem [thread:$0]  %s3, 4096, %s43, [#allocation6], 64, 64, 4
    $region17: #{tpu_custom_call.1} parent=1 // pred_fallthru
      _
    // Predicated region
    $region18: #{tpu_custom_call.1} parent=1 // pred_check
      _
    $region19: #{tpu_custom_call.1} parent=1 // pred_check_branch
      %50 = sbr.rel (0) target = $region21
    $region20: #{tpu_custom_call.1} parent=1 // pred_region
      _
    $region21: #{tpu_custom_call.1} parent=1 // pred_fallthru
      _
    // Predicated region
    $region22: #{tpu_custom_call.1} parent=1 // pred_check
      _
    $region23: #{tpu_custom_call.1} parent=1 // pred_check_branch
      %52 = sbr.rel (0) target = $region25
    $region24: #{tpu_custom_call.1} parent=1 // pred_region
      %53 = dma.done [#allocation3], 128
    $region25: #{tpu_custom_call.1} parent=1 // pred_fallthru
      _
    // Predicated region
    $region26: #{tpu_custom_call.1} parent=1 // pred_check
      _
    $region27: #{tpu_custom_call.1} parent=1 // pred_check_branch
      %55 = sbr.rel (0) target = $region29
    $region28: #{tpu_custom_call.1} parent=1 // pred_region
      %56 = dma.done [#allocation6], 4096
    $region29: #{tpu_custom_call.1} parent=1 // pred_fallthru
      _
    // Predicated region
    $region30: #{tpu_custom_call.1} parent=1 // pred_check
      _
    $region31: #{tpu_custom_call.1} parent=1 // pred_check_branch
      %58 = sbr.rel (0) target = $region33
    $region32: #{tpu_custom_call.1} parent=1 // pred_region
      %59 = dma.done [#allocation6], 4096
    $region33: #{tpu_custom_call.1} parent=1 // pred_fallthru
      _
    %v61 = vld [vmem:[#allocation2] sm:$0xff]
    %v62 = vpack.c.bf16 %v61, %v61
    %v63 = vld [vmem:[#allocation5] sm:$0xff]
    %v64 = vld [vmem:[#allocation5 + $0x8] sm:$0xff]
    %v65 = vld [vmem:[#allocation5 + $0x10] sm:$0xff]
    %v66 = vld [vmem:[#allocation5 + $0x18] sm:$0xff]
    %v67 = vld [vmem:[#allocation5 + $0x20] sm:$0xff]
    %v68 = vld [vmem:[#allocation5 + $0x28] sm:$0xff]
    %v69 = vld [vmem:[#allocation5 + $0x30] sm:$0xff]
    %v70 = vld [vmem:[#allocation5 + $0x38] sm:$0xff]
    %v71 = vld [vmem:[#allocation5 + $0x40] sm:$0xff]
    %v72 = vld [vmem:[#allocation5 + $0x48] sm:$0xff]
    %v73 = vld [vmem:[#allocation5 + $0x50] sm:$0xff]
    %v74 = vld [vmem:[#allocation5 + $0x58] sm:$0xff]
    %v75 = vld [vmem:[#allocation5 + $0x60] sm:$0xff]
    %v76 = vld [vmem:[#allocation5 + $0x68] sm:$0xff]
    %v77 = vld [vmem:[#allocation5 + $0x70] sm:$0xff]
    %v78 = vld [vmem:[#allocation5 + $0x78] sm:$0xff]
    %v79 = vld [vmem:[#allocation5 + $0x80] sm:$0xff]
    %v80 = vld [vmem:[#allocation5 + $0x88] sm:$0xff]
    %v81 = vld [vmem:[#allocation5 + $0x90] sm:$0xff]
    %v82 = vld [vmem:[#allocation5 + $0x98] sm:$0xff]
    %v83 = vld [vmem:[#allocation5 + $0xa0] sm:$0xff]
    %v84 = vld [vmem:[#allocation5 + $0xa8] sm:$0xff]
    %v85 = vld [vmem:[#allocation5 + $0xb0] sm:$0xff]
    %v86 = vld [vmem:[#allocation5 + $0xb8] sm:$0xff]
    %v87 = vld [vmem:[#allocation5 + $0xc0] sm:$0xff]
    %v88 = vld [vmem:[#allocation5 + $0xc8] sm:$0xff]
    %v89 = vld [vmem:[#allocation5 + $0xd0] sm:$0xff]
    %v90 = vld [vmem:[#allocation5 + $0xd8] sm:$0xff]
    %v91 = vld [vmem:[#allocation5 + $0xe0] sm:$0xff]
    %v92 = vld [vmem:[#allocation5 + $0xe8] sm:$0xff]
    %v93 = vld [vmem:[#allocation5 + $0xf0] sm:$0xff]
    %v94 = vld [vmem:[#allocation5 + $0xf8] sm:$0xff]
    %v95 = vld [vmem:[%s2] sm:$0xf]
    %v97 = vlaneseq
    %v98 = vshrl.u32 %v97, 7
    %v99 = vsub.s32 0, %v98
    %v100 = vrot.slane %v95, %v99
    %v101 = vlaneseq
    %v102 = vshrl.u32 %v101, 7
    %v103 = vsub.s32 1, %v102
    %v104 = vrot.slane %v95, %v103
    %v105 = vlaneseq
    %v106 = vshrl.u32 %v105, 7
    %v107 = vsub.s32 2, %v106
    %v108 = vrot.slane %v95, %v107
    %v109 = vlaneseq
    %v110 = vshrl.u32 %v109, 7
    %v111 = vsub.s32 3, %v110
    %v112 = vrot.slane %v95, %v111
    %v149 = vunpack.c.l.b16 %v63
    %v150 = vunpack.c.h.b16 %v63
    %v151 = vunpack.c.l.b16 %v64
    %v152 = vunpack.c.h.b16 %v64
    %v153 = vunpack.c.l.b16 %v65
    %v154 = vunpack.c.h.b16 %v65
    %v155 = vunpack.c.l.b16 %v66
    %v156 = vunpack.c.h.b16 %v66
    %v157 = vunpack.c.l.b16 %v67
    %v158 = vunpack.c.h.b16 %v67
    %v159 = vunpack.c.l.b16 %v68
    %v160 = vunpack.c.h.b16 %v68
    %v161 = vunpack.c.l.b16 %v69
    %v162 = vunpack.c.h.b16 %v69
    %v163 = vunpack.c.l.b16 %v70
    %v164 = vunpack.c.h.b16 %v70
    %v165 = vunpack.c.l.b16 %v71
    %v166 = vunpack.c.h.b16 %v71
    %v167 = vunpack.c.l.b16 %v72
    %v168 = vunpack.c.h.b16 %v72
    %v169 = vunpack.c.l.b16 %v73
    %v170 = vunpack.c.h.b16 %v73
    %v171 = vunpack.c.l.b16 %v74
    %v172 = vunpack.c.h.b16 %v74
    %v173 = vunpack.c.l.b16 %v75
    %v174 = vunpack.c.h.b16 %v75
    %v175 = vunpack.c.l.b16 %v76
    %v176 = vunpack.c.h.b16 %v76
    %v177 = vunpack.c.l.b16 %v77
    %v178 = vunpack.c.h.b16 %v77
    %v179 = vunpack.c.l.b16 %v78
    %v180 = vunpack.c.h.b16 %v78
    %v181 = vunpack.c.l.b16 %v79
    %v182 = vunpack.c.h.b16 %v79
    %v183 = vunpack.c.l.b16 %v80
    %v184 = vunpack.c.h.b16 %v80
    %v185 = vunpack.c.l.b16 %v81
    %v186 = vunpack.c.h.b16 %v81
    %v187 = vunpack.c.l.b16 %v82
    %v188 = vunpack.c.h.b16 %v82
    %v189 = vunpack.c.l.b16 %v83
    %v190 = vunpack.c.h.b16 %v83
    %v191 = vunpack.c.l.b16 %v84
    %v192 = vunpack.c.h.b16 %v84
    %v193 = vunpack.c.l.b16 %v85
    %v194 = vunpack.c.h.b16 %v85
    %v195 = vunpack.c.l.b16 %v86
    %v196 = vunpack.c.h.b16 %v86
    %v197 = vunpack.c.l.b16 %v87
    %v198 = vunpack.c.h.b16 %v87
    %v199 = vunpack.c.l.b16 %v88
    %v200 = vunpack.c.h.b16 %v88
    %v201 = vunpack.c.l.b16 %v89
    %v202 = vunpack.c.h.b16 %v89
    %v203 = vunpack.c.l.b16 %v90
    %v204 = vunpack.c.h.b16 %v90
    %v205 = vunpack.c.l.b16 %v91
    %v206 = vunpack.c.h.b16 %v91
    %v207 = vunpack.c.l.b16 %v92
    %v208 = vunpack.c.h.b16 %v92
    %v209 = vunpack.c.l.b16 %v93
    %v210 = vunpack.c.h.b16 %v93
    %v211 = vunpack.c.l.b16 %v94
    %v212 = vunpack.c.h.b16 %v94
    %v213 = vpack.c.b16 %v153, %v149
    %v214 = vpack.c.b16 %v154, %v150
    %v215 = vpack.c.b16 %v155, %v151
    %v216 = vpack.c.b16 %v156, %v152
    %v217 = vpack.c.b16 %v161, %v157
    %v218 = vpack.c.b16 %v162, %v158
    %v219 = vpack.c.b16 %v163, %v159
    %v220 = vpack.c.b16 %v164, %v160
    %v221 = vpack.c.b16 %v169, %v165
    %v222 = vpack.c.b16 %v170, %v166
    %v223 = vpack.c.b16 %v171, %v167
    %v224 = vpack.c.b16 %v172, %v168
    %v225 = vpack.c.b16 %v177, %v173
    %v226 = vpack.c.b16 %v178, %v174
    %v227 = vpack.c.b16 %v179, %v175
    %v228 = vpack.c.b16 %v180, %v176
    %v229 = vpack.c.b16 %v185, %v181
    %v230 = vpack.c.b16 %v186, %v182
    %v231 = vpack.c.b16 %v187, %v183
    %v232 = vpack.c.b16 %v188, %v184
    %v233 = vpack.c.b16 %v193, %v189
    %v234 = vpack.c.b16 %v194, %v190
    %v235 = vpack.c.b16 %v195, %v191
    %v236 = vpack.c.b16 %v196, %v192
    %v237 = vpack.c.b16 %v201, %v197
    %v238 = vpack.c.b16 %v202, %v198
    %v239 = vpack.c.b16 %v203, %v199
    %v240 = vpack.c.b16 %v204, %v200
    %v241 = vpack.c.b16 %v209, %v205
    %v242 = vpack.c.b16 %v210, %v206
    %v243 = vpack.c.b16 %v211, %v207
    %v244 = vpack.c.b16 %v212, %v208
    %277 = vmatprep.subr.bf16.mxu0 %v214
    %278 = vmatpush1.bf16.msra.mxu0 %v213
    %279 = vmatprep.subr.bf16.mxu0 %v218
    %280 = vmatpush1.bf16.msra.mxu0 %v217
    %281 = vmatprep.subr.bf16.mxu0 %v222
    %282 = vmatpush1.bf16.msra.mxu0 %v221
    %283 = vmatprep.subr.bf16.mxu0 %v226
    %284 = vmatpush1.bf16.msra.mxu0 %v225
    %285 = vmatprep.subr.bf16.mxu0 %v230
    %286 = vmatpush1.bf16.msra.mxu0 %v229
    %287 = vmatprep.subr.bf16.mxu0 %v234
    %288 = vmatpush1.bf16.msra.mxu0 %v233
    %289 = vmatprep.subr.bf16.mxu0 %v238
    %290 = vmatpush1.bf16.msra.mxu0 %v237
    %291 = vmatprep.subr.bf16.mxu0 %v242
    %292 = vmatpush1.bf16.msra.mxu0 %v241
    %293 = vmatprep.subr.bf16.mxu0 0
    %294 = vmatpush1.bf16.msra.mxu0 0
    %295 = vmatprep.subr.bf16.mxu0 0
    %296 = vmatpush1.bf16.msra.mxu0 0
    %297 = vmatprep.subr.bf16.mxu0 0
    %298 = vmatpush1.bf16.msra.mxu0 0
    %299 = vmatprep.subr.bf16.mxu0 0
    %300 = vmatpush1.bf16.msra.mxu0 0
    %301 = vmatprep.subr.bf16.mxu0 0
    %302 = vmatpush1.bf16.msra.mxu0 0
    %303 = vmatprep.subr.bf16.mxu0 0
    %304 = vmatpush1.bf16.msra.mxu0 0
    %305 = vmatprep.subr.bf16.mxu0 0
    %306 = vmatpush1.bf16.msra.mxu0 0
    %307 = vmatprep.subr.bf16.mxu0 0
    %308 = vmatpush1.bf16.msra.mxu0 0
    %309 = vmatprep.mubr.bf16.mxu0 0
    %310 = vmatmul.mubr.bf16.gmra.mrb[0].mxu0 %v62
    %v311 = vpop.f32.mrb[0].mxu0
    %v312 = vadd.f32 %v100, %v311
    %v313 = vpop.f32.mrb[0].mxu0
    %v314 = vadd.f32 %v104, %v313
    %v315 = vpop.f32.mrb[0].mxu0
    %v316 = vpop.f32.mrb[0].mxu0
    %317 = vdwg.mxu0
    %318 = vmatprep.subr.bf16.mxu0 %v216
    %319 = vmatpush1.bf16.msra.mxu0 %v215
    %320 = vmatprep.subr.bf16.mxu0 %v220
    %321 = vmatpush1.bf16.msra.mxu0 %v219
    %322 = vmatprep.subr.bf16.mxu0 %v224
    %323 = vmatpush1.bf16.msra.mxu0 %v223
    %324 = vmatprep.subr.bf16.mxu0 %v228
    %325 = vmatpush1.bf16.msra.mxu0 %v227
    %326 = vmatprep.subr.bf16.mxu0 %v232
    %327 = vmatpush1.bf16.msra.mxu0 %v231
    %328 = vmatprep.subr.bf16.mxu0 %v236
    %329 = vmatpush1.bf16.msra.mxu0 %v235
    %330 = vmatprep.subr.bf16.mxu0 %v240
    %331 = vmatpush1.bf16.msra.mxu0 %v239
    %332 = vmatprep.subr.bf16.mxu0 %v244
    %333 = vmatpush1.bf16.msra.mxu0 %v243
    %334 = vmatprep.subr.bf16.mxu0 0
    %335 = vmatpush1.bf16.msra.mxu0 0
    %336 = vmatprep.subr.bf16.mxu0 0
    %337 = vmatpush1.bf16.msra.mxu0 0
    %338 = vmatprep.subr.bf16.mxu0 0
    %339 = vmatpush1.bf16.msra.mxu0 0
    %340 = vmatprep.subr.bf16.mxu0 0
    %341 = vmatpush1.bf16.msra.mxu0 0
    %342 = vmatprep.subr.bf16.mxu0 0
    %343 = vmatpush1.bf16.msra.mxu0 0
    %344 = vmatprep.subr.bf16.mxu0 0
    %345 = vmatpush1.bf16.msra.mxu0 0
    %346 = vmatprep.subr.bf16.mxu0 0
    %347 = vmatpush1.bf16.msra.mxu0 0
    %348 = vmatprep.subr.bf16.mxu0 0
    %349 = vmatpush1.bf16.msra.mxu0 0
    %350 = vmatprep.mubr.bf16.mxu0 0
    %351 = vmatmul.mubr.bf16.gmra.mrb[0].mxu0 %v62
    %v352 = vpop.f32.mrb[0].mxu0
    %v353 = vadd.f32 %v108, %v352
    %v354 = vpop.f32.mrb[0].mxu0
    %v355 = vadd.f32 %v112, %v354
    %v356 = vpop.f32.mrb[0].mxu0
    %v357 = vpop.f32.mrb[0].mxu0
    %358 = vdwg.mxu0
    %v359 = vmax.f32 %v312, 0.0
    %v360 = vmax.f32 %v314, 0.0
    %v361 = vmax.f32 %v353, 0.0
    %v362 = vmax.f32 %v355, 0.0
    %v363 = vpack.c.bf16 %v359, %v359
    %v364 = vpack.c.bf16 %v360, %v360
    %v365 = vpack.c.bf16 %v361, %v361
    %v366 = vpack.c.bf16 %v362, %v362
    %v367 = vld [vmem:[#allocation7] sm:$0xf]
    %v368 = vld [vmem:[#allocation7 + $0x4] sm:$0xf]
    %v369 = vld [vmem:[#allocation7 + $0x8] sm:$0xf]
    %v370 = vld [vmem:[#allocation7 + $0xc] sm:$0xf]
    %v371 = vld [vmem:[#allocation7 + $0x10] sm:$0xf]
    %v372 = vld [vmem:[#allocation7 + $0x14] sm:$0xf]
    %v373 = vld [vmem:[#allocation7 + $0x18] sm:$0xf]
    %v374 = vld [vmem:[#allocation7 + $0x1c] sm:$0xf]
    %v375 = vld [vmem:[#allocation7 + $0x20] sm:$0xf]
    %v376 = vld [vmem:[#allocation7 + $0x24] sm:$0xf]
    %v377 = vld [vmem:[#allocation7 + $0x28] sm:$0xf]
    %v378 = vld [vmem:[#allocation7 + $0x2c] sm:$0xf]
    %v379 = vld [vmem:[#allocation7 + $0x30] sm:$0xf]
    %v380 = vld [vmem:[#allocation7 + $0x34] sm:$0xf]
    %v381 = vld [vmem:[#allocation7 + $0x38] sm:$0xf]
    %v382 = vld [vmem:[#allocation7 + $0x3c] sm:$0xf]
    %v383 = vld [vmem:[#allocation7 + $0x40] sm:$0xf]
    %v384 = vld [vmem:[#allocation7 + $0x44] sm:$0xf]
    %v385 = vld [vmem:[#allocation7 + $0x48] sm:$0xf]
    %v386 = vld [vmem:[#allocation7 + $0x4c] sm:$0xf]
    %v387 = vld [vmem:[#allocation7 + $0x50] sm:$0xf]
    %v388 = vld [vmem:[#allocation7 + $0x54] sm:$0xf]
    %v389 = vld [vmem:[#allocation7 + $0x58] sm:$0xf]
    %v390 = vld [vmem:[#allocation7 + $0x5c] sm:$0xf]
    %v391 = vld [vmem:[#allocation7 + $0x60] sm:$0xf]
    %v392 = vld [vmem:[#allocation7 + $0x64] sm:$0xf]
    %v393 = vld [vmem:[#allocation7 + $0x68] sm:$0xf]
    %v394 = vld [vmem:[#allocation7 + $0x6c] sm:$0xf]
    %v395 = vld [vmem:[#allocation7 + $0x70] sm:$0xf]
    %v396 = vld [vmem:[#allocation7 + $0x74] sm:$0xf]
    %v397 = vld [vmem:[#allocation7 + $0x78] sm:$0xf]
    %v398 = vld [vmem:[#allocation7 + $0x7c] sm:$0xf]
    %v399 = vld [vmem:[#allocation7 + $0x80] sm:$0xf]
    %v400 = vld [vmem:[#allocation7 + $0x84] sm:$0xf]
    %v401 = vld [vmem:[#allocation7 + $0x88] sm:$0xf]
    %v402 = vld [vmem:[#allocation7 + $0x8c] sm:$0xf]
    %v403 = vld [vmem:[#allocation7 + $0x90] sm:$0xf]
    %v404 = vld [vmem:[#allocation7 + $0x94] sm:$0xf]
    %v405 = vld [vmem:[#allocation7 + $0x98] sm:$0xf]
    %v406 = vld [vmem:[#allocation7 + $0x9c] sm:$0xf]
    %v407 = vld [vmem:[#allocation7 + $0xa0] sm:$0xf]
    %v408 = vld [vmem:[#allocation7 + $0xa4] sm:$0xf]
    %v409 = vld [vmem:[#allocation7 + $0xa8] sm:$0xf]
    %v410 = vld [vmem:[#allocation7 + $0xac] sm:$0xf]
    %v411 = vld [vmem:[#allocation7 + $0xb0] sm:$0xf]
    %v412 = vld [vmem:[#allocation7 + $0xb4] sm:$0xf]
    %v413 = vld [vmem:[#allocation7 + $0xb8] sm:$0xf]
    %v414 = vld [vmem:[#allocation7 + $0xbc] sm:$0xf]
    %v415 = vld [vmem:[#allocation7 + $0xc0] sm:$0xf]
    %v416 = vld [vmem:[#allocation7 + $0xc4] sm:$0xf]
    %v417 = vld [vmem:[#allocation7 + $0xc8] sm:$0xf]
    %v418 = vld [vmem:[#allocation7 + $0xcc] sm:$0xf]
    %v419 = vld [vmem:[#allocation7 + $0xd0] sm:$0xf]
    %v420 = vld [vmem:[#allocation7 + $0xd4] sm:$0xf]
    %v421 = vld [vmem:[#allocation7 + $0xd8] sm:$0xf]
    %v422 = vld [vmem:[#allocation7 + $0xdc] sm:$0xf]
    %v423 = vld [vmem:[#allocation7 + $0xe0] sm:$0xf]
    %v424 = vld [vmem:[#allocation7 + $0xe4] sm:$0xf]
    %v425 = vld [vmem:[#allocation7 + $0xe8] sm:$0xf]
    %v426 = vld [vmem:[#allocation7 + $0xec] sm:$0xf]
    %v427 = vld [vmem:[#allocation7 + $0xf0] sm:$0xf]
    %v428 = vld [vmem:[#allocation7 + $0xf4] sm:$0xf]
    %v429 = vld [vmem:[#allocation7 + $0xf8] sm:$0xf]
    %v430 = vld [vmem:[#allocation7 + $0xfc] sm:$0xf]
    %v431 = vld [vmem:[%s4] sm:$0x1]
    %v433 = vlaneseq
    %v434 = vshrl.u32 %v433, 7
    %v435 = vsub.s32 0, %v434
    %v436 = vrot.slane %v431, %v435
    %v502 = vunpack.c.l.b16 %v367
    %v503 = vunpack.c.l.b16 %v368
    %v504 = vunpack.c.l.b16 %v369
    %v505 = vunpack.c.l.b16 %v370
    %v506 = vunpack.c.l.b16 %v371
    %v507 = vunpack.c.l.b16 %v372
    %v508 = vunpack.c.l.b16 %v373
    %v509 = vunpack.c.l.b16 %v374
    %v510 = vunpack.c.l.b16 %v375
    %v511 = vunpack.c.l.b16 %v376
    %v512 = vunpack.c.l.b16 %v377
    %v513 = vunpack.c.l.b16 %v378
    %v514 = vunpack.c.l.b16 %v379
    %v515 = vunpack.c.l.b16 %v380
    %v516 = vunpack.c.l.b16 %v381
    %v517 = vunpack.c.l.b16 %v382
    %v518 = vunpack.c.l.b16 %v383
    %v519 = vunpack.c.l.b16 %v384
    %v520 = vunpack.c.l.b16 %v385
    %v521 = vunpack.c.l.b16 %v386
    %v522 = vunpack.c.l.b16 %v387
    %v523 = vunpack.c.l.b16 %v388
    %v524 = vunpack.c.l.b16 %v389
    %v525 = vunpack.c.l.b16 %v390
    %v526 = vunpack.c.l.b16 %v391
    %v527 = vunpack.c.l.b16 %v392
    %v528 = vunpack.c.l.b16 %v393
    %v529 = vunpack.c.l.b16 %v394
    %v530 = vunpack.c.l.b16 %v395
    %v531 = vunpack.c.l.b16 %v396
    %v532 = vunpack.c.l.b16 %v397
    %v533 = vunpack.c.l.b16 %v398
    %v534 = vunpack.c.l.b16 %v399
    %v535 = vunpack.c.l.b16 %v400
    %v536 = vunpack.c.l.b16 %v401
    %v537 = vunpack.c.l.b16 %v402
    %v538 = vunpack.c.l.b16 %v403
    %v539 = vunpack.c.l.b16 %v404
    %v540 = vunpack.c.l.b16 %v405
    %v541 = vunpack.c.l.b16 %v406
    %v542 = vunpack.c.l.b16 %v407
    %v543 = vunpack.c.l.b16 %v408
    %v544 = vunpack.c.l.b16 %v409
    %v545 = vunpack.c.l.b16 %v410
    %v546 = vunpack.c.l.b16 %v411
    %v547 = vunpack.c.l.b16 %v412
    %v548 = vunpack.c.l.b16 %v413
    %v549 = vunpack.c.l.b16 %v414
    %v550 = vunpack.c.l.b16 %v415
    %v551 = vunpack.c.l.b16 %v416
    %v552 = vunpack.c.l.b16 %v417
    %v553 = vunpack.c.l.b16 %v418
    %v554 = vunpack.c.l.b16 %v419
    %v555 = vunpack.c.l.b16 %v420
    %v556 = vunpack.c.l.b16 %v421
    %v557 = vunpack.c.l.b16 %v422
    %v558 = vunpack.c.l.b16 %v423
    %v559 = vunpack.c.l.b16 %v424
    %v560 = vunpack.c.l.b16 %v425
    %v561 = vunpack.c.l.b16 %v426
    %v562 = vunpack.c.l.b16 %v427
    %v563 = vunpack.c.l.b16 %v428
    %v564 = vunpack.c.l.b16 %v429
    %v565 = vunpack.c.l.b16 %v430
    %v566 = vpack.c.b16 %v503, %v502
    %v567 = vpack.c.b16 %v505, %v504
    %v568 = vpack.c.b16 %v507, %v506
    %v569 = vpack.c.b16 %v509, %v508
    %v570 = vpack.c.b16 %v511, %v510
    %v571 = vpack.c.b16 %v513, %v512
    %v572 = vpack.c.b16 %v515, %v514
    %v573 = vpack.c.b16 %v517, %v516
    %v574 = vpack.c.b16 %v519, %v518
    %v575 = vpack.c.b16 %v521, %v520
    %v576 = vpack.c.b16 %v523, %v522
    %v577 = vpack.c.b16 %v525, %v524
    %v578 = vpack.c.b16 %v527, %v526
    %v579 = vpack.c.b16 %v529, %v528
    %v580 = vpack.c.b16 %v531, %v530
    %v581 = vpack.c.b16 %v533, %v532
    %v582 = vpack.c.b16 %v535, %v534
    %v583 = vpack.c.b16 %v537, %v536
    %v584 = vpack.c.b16 %v539, %v538
    %v585 = vpack.c.b16 %v541, %v540
    %v586 = vpack.c.b16 %v543, %v542
    %v587 = vpack.c.b16 %v545, %v544
    %v588 = vpack.c.b16 %v547, %v546
    %v589 = vpack.c.b16 %v549, %v548
    %v590 = vpack.c.b16 %v551, %v550
    %v591 = vpack.c.b16 %v553, %v552
    %v592 = vpack.c.b16 %v555, %v554
    %v593 = vpack.c.b16 %v557, %v556
    %v594 = vpack.c.b16 %v559, %v558
    %v595 = vpack.c.b16 %v561, %v560
    %v596 = vpack.c.b16 %v563, %v562
    %v597 = vpack.c.b16 %v565, %v564
    %630 = vmatprep.subr.bf16.mxu0 0
    %631 = vmatpush1.bf16.msra.mxu0 %v566
    %632 = vmatprep.subr.bf16.mxu0 0
    %633 = vmatpush1.bf16.msra.mxu0 %v567
    %634 = vmatprep.subr.bf16.mxu0 0
    %635 = vmatpush1.bf16.msra.mxu0 %v568
    %636 = vmatprep.subr.bf16.mxu0 0
    %637 = vmatpush1.bf16.msra.mxu0 %v569
    %638 = vmatprep.subr.bf16.mxu0 0
    %639 = vmatpush1.bf16.msra.mxu0 %v570
    %640 = vmatprep.subr.bf16.mxu0 0
    %641 = vmatpush1.bf16.msra.mxu0 %v571
    %642 = vmatprep.subr.bf16.mxu0 0
    %643 = vmatpush1.bf16.msra.mxu0 %v572
    %644 = vmatprep.subr.bf16.mxu0 0
    %645 = vmatpush1.bf16.msra.mxu0 %v573
    %646 = vmatprep.subr.bf16.mxu0 0
    %647 = vmatpush1.bf16.msra.mxu0 %v574
    %648 = vmatprep.subr.bf16.mxu0 0
    %649 = vmatpush1.bf16.msra.mxu0 %v575
    %650 = vmatprep.subr.bf16.mxu0 0
    %651 = vmatpush1.bf16.msra.mxu0 %v576
    %652 = vmatprep.subr.bf16.mxu0 0
    %653 = vmatpush1.bf16.msra.mxu0 %v577
    %654 = vmatprep.subr.bf16.mxu0 0
    %655 = vmatpush1.bf16.msra.mxu0 %v578
    %656 = vmatprep.subr.bf16.mxu0 0
    %657 = vmatpush1.bf16.msra.mxu0 %v579
    %658 = vmatprep.subr.bf16.mxu0 0
    %659 = vmatpush1.bf16.msra.mxu0 %v580
    %660 = vmatprep.subr.bf16.mxu0 0
    %661 = vmatpush1.bf16.msra.mxu0 %v581
    %662 = vmatprep.mubr.bf16.mxu0 %v364
    %663 = vmatmul.mubr.bf16.gmra.mrb[0].mxu0 %v363
    %v664 = vpop.f32.mrb[0].mxu0
    %v665 = vadd.f32 %v436, %v664
    %v666 = vpop.f32.mrb[0].mxu0
    %v667 = vpop.f32.mrb[0].mxu0
    %v668 = vpop.f32.mrb[0].mxu0
    %669 = vdwg.mxu0
    %670 = vmatprep.subr.bf16.mxu0 0
    %671 = vmatpush1.bf16.msra.mxu0 %v582
    %672 = vmatprep.subr.bf16.mxu0 0
    %673 = vmatpush1.bf16.msra.mxu0 %v583
    %674 = vmatprep.subr.bf16.mxu0 0
    %675 = vmatpush1.bf16.msra.mxu0 %v584
    %676 = vmatprep.subr.bf16.mxu0 0
    %677 = vmatpush1.bf16.msra.mxu0 %v585
    %678 = vmatprep.subr.bf16.mxu0 0
    %679 = vmatpush1.bf16.msra.mxu0 %v586
    %680 = vmatprep.subr.bf16.mxu0 0
    %681 = vmatpush1.bf16.msra.mxu0 %v587
    %682 = vmatprep.subr.bf16.mxu0 0
    %683 = vmatpush1.bf16.msra.mxu0 %v588
    %684 = vmatprep.subr.bf16.mxu0 0
    %685 = vmatpush1.bf16.msra.mxu0 %v589
    %686 = vmatprep.subr.bf16.mxu0 0
    %687 = vmatpush1.bf16.msra.mxu0 %v590
    %688 = vmatprep.subr.bf16.mxu0 0
    %689 = vmatpush1.bf16.msra.mxu0 %v591
    %690 = vmatprep.subr.bf16.mxu0 0
    %691 = vmatpush1.bf16.msra.mxu0 %v592
    %692 = vmatprep.subr.bf16.mxu0 0
    %693 = vmatpush1.bf16.msra.mxu0 %v593
    %694 = vmatprep.subr.bf16.mxu0 0
    %695 = vmatpush1.bf16.msra.mxu0 %v594
    %696 = vmatprep.subr.bf16.mxu0 0
    %697 = vmatpush1.bf16.msra.mxu0 %v595
    %698 = vmatprep.subr.bf16.mxu0 0
    %699 = vmatpush1.bf16.msra.mxu0 %v596
    %700 = vmatprep.subr.bf16.mxu0 0
    %701 = vmatpush1.bf16.msra.mxu0 %v597
    %702 = vmatprep.mubr.bf16.mxu0 %v366
    %703 = vmatmul.mubr.bf16.gmra.mrb[0].mxu0 %v365
    %v704 = vpop.f32.mrb[0].mxu0
    %v705 = vadd.f32 %v665, %v704
    %v706 = vpop.f32.mrb[0].mxu0
    %v707 = vpop.f32.mrb[0].mxu0
    %v708 = vpop.f32.mrb[0].mxu0
    %709 = vdwg.mxu0
    %710 = vst [vmem:[#allocation8] sm:$0xff] %v705
    // Predicated region
    $region34: #{tpu_custom_call.1} parent=1 // pred_check
      _
    $region35: #{tpu_custom_call.1} parent=1 // pred_check_branch
      %712 = sbr.rel (0) target = $region37
    $region36: #{tpu_custom_call.1} parent=1 // pred_region
      %s714 = ssub.s32 128, 128
      %715 = vsyncadd [#allocation4], %s714
      %s717 = sshll.u32 [#allocation8], 4
      %s718 = int_to_ptr.vmem [resolvable:$true] %s717
      %720 = dma.vmem_to_hbm [thread:$0]  %s718, 128, %s5, [#allocation4]
    $region37: #{tpu_custom_call.1} parent=1 // pred_fallthru
      _
    // Predicated region
    $region38: #{tpu_custom_call.1} parent=1 // pred_check
      _
    $region39: #{tpu_custom_call.1} parent=1 // pred_check_branch
      %722 = sbr.rel (0) target = $region41
    $region40: #{tpu_custom_call.1} parent=1 // pred_region
      %723 = dma.done [#allocation4], 128
    $region41: #{tpu_custom_call.1} parent=1 // pred_fallthru
      _
    %724 = vsyncpa [#allocation3], 1
    %725 = vsyncpa [#allocation6], 1
    %726 = vsyncpa [#allocation4], 1

</llo_original>
